<compile_context>
chip_gen: v5e
topology: v5e:2x2
jax: 0.10.0
libtpu: 0.0.40
codegen_flags: <defaults>
</compile_context>

<pallas_src>
import jax
import jax.numpy as jnp
from jax.experimental import pallas as pl
from jax.experimental.pallas import tpu as pltpu


def mlp_kernel(x_ref, w1_ref, b1_ref, w2_ref, b2_ref, o_ref):
    # Cast activations to the weights' (compute) dtype in-kernel; a VPU cast
    # hidden under the DMA/MXU instead of a separate XLA pass over x in HBM.
    x = x_ref[...].astype(w1_ref.dtype)
    # Hidden layer: MXU matmul with f32 accumulation; bias + ReLU in f32 (VPU).
    h = jnp.dot(x, w1_ref[...], preferred_element_type=jnp.float32)
    h = jnp.maximum(h + b1_ref[...], 0.0)
    # Output layer: cast the f32 activations to the compute dtype for the MXU;
    # accumulate and add the bias in f32.
    o = jnp.dot(h.astype(w2_ref.dtype), w2_ref[...],
                preferred_element_type=jnp.float32)
    o_ref[...] = (o + b2_ref[...]).astype(o_ref.dtype)


def _round_up(x, m):
    return ((x + m - 1) // m) * m


def prepare_params(w1, b1, w2, b2, compute_dtype=jnp.bfloat16):
    """One-time parameter prep (hoisted out of the per-call path).

    Weights are stored in the MXU compute dtype (bf16 recommended on
    v5e/v6e/v7x; pass jnp.float32 for a bit-exact path).  Biases stay f32 —
    bias adds and ReLU run in f32 on the VPU inside the kernel.
    """
    return (w1.astype(compute_dtype), b1.astype(jnp.float32),
            w2.astype(compute_dtype), b2.astype(jnp.float32))


def agent_net_forward(x, w1, b1, w2, b2, *, tile_b=1024, interpret=False):
    """relu(x @ w1 + b1) @ w2 + b2  == AgentNet.forward.

    x:  (B, input_size) f32, streamed per batch tile (cast in-kernel).
    w1: (input_size, hidden), w2: (hidden, output_size) in any dtype
        (see prepare_params); VMEM-resident across grid steps.
    b1: (1, hidden) f32, b2: (1, output_size) f32.
    Returns (B, output_size) f32.
    """
    B, in_dim = x.shape
    hidden = w1.shape[1]
    out_dim = w2.shape[1]

    # Batch tiling: large tiles amortise the ~0.35us/step grid overhead, but
    # keep >= 2 grid steps when the batch allows it so the "parallel" batch
    # axis shards across both v7x TensorCores.  The tile is derived from B so
    # x padding is at most a few rows (and zero for tile-aligned batches).
    b8 = _round_up(B, 8)
    half = _round_up(pl.cdiv(b8, 2), 8)
    tile_b = max(8, min(tile_b, half))
    b_pad = _round_up(B, tile_b)
    x_p = x if b_pad == B else jnp.pad(x, ((0, b_pad - B), (0, 0)))

    grid = (b_pad // tile_b,)

    # Advisory cost estimate so XLA schedules surrounding ops sensibly.
    cost = pl.CostEstimate(
        flops=2 * b_pad * (in_dim * hidden + hidden * out_dim),
        transcendentals=0,
        bytes_accessed=(b_pad * in_dim * x.dtype.itemsize
                        + b_pad * out_dim * 4
                        + w1.size * w1.dtype.itemsize
                        + w2.size * w2.dtype.itemsize
                        + (b1.size + b2.size) * 4))

    # Explicit VMEM budget: double-buffered x/out tiles + resident params +
    # hidden-activation temporaries, with 2x headroom.  Keeps large tile
    # sweeps from silently blowing past v7x's smaller scoped VMEM limit.
    vmem_est = (2 * tile_b * in_dim * x.dtype.itemsize
                + 2 * tile_b * out_dim * 4
                + 2 * (w1.size * w1.dtype.itemsize + w2.size * w2.dtype.itemsize)
                + 2 * (b1.size + b2.size) * 4
                + 2 * tile_b * hidden * 4)
    vmem_limit = int(min(max(2 * vmem_est, 16 * 1024 * 1024),
                         100 * 1024 * 1024))

    out = pl.pallas_call(
        mlp_kernel,
        out_shape=jax.ShapeDtypeStruct((b_pad, out_dim), jnp.float32),
        grid_spec=pl.GridSpec(
            grid=grid,
            in_specs=[
                # Only x streams per grid step.
                pl.BlockSpec((tile_b, in_dim), lambda i: (i, 0)),
                # Constant index_maps -> weights/biases fetched once and kept
                # VMEM-resident across all grid steps (no per-step re-DMA).
                pl.BlockSpec((in_dim, hidden), lambda i: (0, 0)),
                pl.BlockSpec((1, hidden), lambda i: (0, 0)),
                pl.BlockSpec((hidden, out_dim), lambda i: (0, 0)),
                pl.BlockSpec((1, out_dim), lambda i: (0, 0)),
            ],
            # Narrow output block: last dim equals the full array dim, so the
            # block is legal and we write only the real out_dim columns (no
            # 128-lane padding, no post-kernel slice copy).
            out_specs=pl.BlockSpec((tile_b, out_dim), lambda i: (i, 0)),
        ),
        compiler_params=pltpu.CompilerParams(
            dimension_semantics=("parallel",),
            vmem_limit_bytes=vmem_limit),
        cost_estimate=cost,
        interpret=interpret,
    )(x_p, w1, b1, w2, b2)

    return out if b_pad == B else out[:B]


def init_params(key, input_size, hidden_dim, output_size):
    """Deterministic init mimicking nn.Linear's uniform(-1/sqrt(fan_in), 1/sqrt(fan_in))."""
    k1, k2, k3, k4 = jax.random.split(key, 4)
    bound1 = 1.0 / jnp.sqrt(input_size)
    bound2 = 1.0 / jnp.sqrt(hidden_dim)
    w1 = jax.random.uniform(k1, (input_size, hidden_dim), jnp.float32, -bound1, bound1)
    b1 = jax.random.uniform(k2, (1, hidden_dim), jnp.float32, -bound1, bound1)
    w2 = jax.random.uniform(k3, (hidden_dim, output_size), jnp.float32, -bound2, bound2)
    b2 = jax.random.uniform(k4, (1, output_size), jnp.float32, -bound2, bound2)
    return w1, b1, w2, b2


if __name__ == "__main__":
    # Small shapes consistent with AgentNet(input_size=32, output_size=16, lr=...).
    B, input_size, hidden_dim, output_size = 8, 32, 256, 16

    key = jax.random.PRNGKey(0)
    kx, kp = jax.random.split(key)
    x = jax.random.normal(kx, (B, input_size), jnp.float32)
    w1, b1, w2, b2 = init_params(kp, input_size, hidden_dim, output_size)

    # Pure-JAX reference of the same forward pass.
    ref = jnp.maximum(x @ w1 + b1, 0.0) @ w2 + b2

    # f32-weight path (bit-exact vs. the reference).
    out_f32 = jax.block_until_ready(agent_net_forward(x, w1, b1, w2, b2))
    assert out_f32.shape == (B, output_size)
    assert jnp.allclose(out_f32, ref, atol=1e-5, rtol=1e-5)

    # bf16-weight steady-state path (recommended on v5e/v6e/v7x): weights cast
    # once via prepare_params, x cast in-kernel, f32 accumulation + f32 bias.
    w1b, b1b, w2b, b2b = prepare_params(w1, b1, w2, b2, jnp.bfloat16)
    out_bf16 = jax.block_until_ready(agent_net_forward(x, w1b, b1b, w2b, b2b))
    assert out_bf16.shape == (B, output_size)
    assert jnp.allclose(out_bf16, ref, atol=5e-2, rtol=5e-2)

    # TODO(synk): torch.optim.Adam (the training step) has no forward-pass
    # Pallas equivalent and is intentionally not implemented.
    print("KERNEL_OK")
</pallas_src>

<mosaic_0001>
module attributes {stable_mosaic.version = 11 : i64} {
  func.func @mlp_kernel(%arg0: i32, %arg1: memref<8x32xf32, #tpu.memory_space<vmem>>, %arg2: memref<32x256xf32, #tpu.memory_space<vmem>>, %arg3: memref<1x256xf32, #tpu.memory_space<vmem>>, %arg4: memref<256x16xf32, #tpu.memory_space<vmem>>, %arg5: memref<1x16xf32, #tpu.memory_space<vmem>>, %arg6: memref<8x16xf32, #tpu.memory_space<vmem>>) attributes {dimension_semantics = [#tpu.dimension_semantics<parallel>], iteration_bounds = array<i64: 1>, scalar_prefetch = 0 : i64, scratch_operands = 0 : i64, tpu.core_type = #tpu.core_type<tc>, window_params = [{transform_indices = @transform_0, window_bounds = array<i64: 8, 32>}, {pipeline_mode = #tpu.pipeline_mode<synchronous>, transform_indices = @transform_1, window_bounds = array<i64: 32, 256>}, {pipeline_mode = #tpu.pipeline_mode<synchronous>, transform_indices = @transform_2, window_bounds = array<i64: 1, 256>}, {pipeline_mode = #tpu.pipeline_mode<synchronous>, transform_indices = @transform_3, window_bounds = array<i64: 256, 16>}, {pipeline_mode = #tpu.pipeline_mode<synchronous>, transform_indices = @transform_4, window_bounds = array<i64: 1, 16>}, {transform_indices = @transform_5, window_bounds = array<i64: 8, 16>}]} {
    %c0 = arith.constant 0 : index
    %c0_0 = arith.constant 0 : index
    %0 = vector.load %arg1[%c0, %c0_0] : memref<8x32xf32, #tpu.memory_space<vmem>>, vector<8x32xf32>
    %c0_1 = arith.constant 0 : index
    %c0_2 = arith.constant 0 : index
    %1 = vector.load %arg2[%c0_1, %c0_2] : memref<32x256xf32, #tpu.memory_space<vmem>>, vector<32x256xf32>
    %cst = arith.constant dense<0.000000e+00> : vector<8x256xf32>
    %2 = tpu.matmul %0, %1, %cst {dimension_numbers = #tpu.dot_dimension_numbers<[1], [0], [0], [1], [0, 0, 1, 1], [], []>} : vector<8x32xf32>, vector<32x256xf32>, vector<8x256xf32> -> vector<8x256xf32>
    %c0_3 = arith.constant 0 : index
    %c0_4 = arith.constant 0 : index
    %3 = vector.load %arg3[%c0_3, %c0_4] : memref<1x256xf32, #tpu.memory_space<vmem>>, vector<1x256xf32>
    %4 = vector.broadcast %3 : vector<1x256xf32> to vector<8x256xf32>
    %5 = arith.addf %2, %4 : vector<8x256xf32>
    %cst_5 = arith.constant 0.000000e+00 : f32
    %6 = vector.broadcast %cst_5 : f32 to vector<8x256xf32>
    %7 = arith.maximumf %5, %6 : vector<8x256xf32>
    %c0_6 = arith.constant 0 : index
    %c0_7 = arith.constant 0 : index
    %8 = vector.load %arg4[%c0_6, %c0_7] : memref<256x16xf32, #tpu.memory_space<vmem>>, vector<256x16xf32>
    %cst_8 = arith.constant dense<0.000000e+00> : vector<8x16xf32>
    %9 = tpu.matmul %7, %8, %cst_8 {dimension_numbers = #tpu.dot_dimension_numbers<[1], [0], [0], [1], [0, 0, 1, 1], [], []>} : vector<8x256xf32>, vector<256x16xf32>, vector<8x16xf32> -> vector<8x16xf32>
    %c0_9 = arith.constant 0 : index
    %c0_10 = arith.constant 0 : index
    %10 = vector.load %arg5[%c0_9, %c0_10] : memref<1x16xf32, #tpu.memory_space<vmem>>, vector<1x16xf32>
    %11 = vector.broadcast %10 : vector<1x16xf32> to vector<8x16xf32>
    %12 = arith.addf %9, %11 : vector<8x16xf32>
    %c0_11 = arith.constant 0 : index
    %c0_12 = arith.constant 0 : index
    %13 = vector.load %arg6[%c0_11, %c0_12] : memref<8x16xf32, #tpu.memory_space<vmem>>, vector<8x16xf32>
    tpu.vector_store %arg6[%c0_11, %c0_12], %12 {strides = array<i32>} : memref<8x16xf32, #tpu.memory_space<vmem>>, vector<8x16xf32>,
    return
  }
  func.func @transform_0(%arg0: i32) -> (i32, i32) {
    %c0_i32 = arith.constant 0 : i32
    %c0_i32_0 = arith.constant 0 : i32
    return %arg0, %c0_i32 : i32, i32
  }
  func.func @transform_1(%arg0: i32) -> (i32, i32) {
    %c0_i32 = arith.constant 0 : i32
    %c0_i32_0 = arith.constant 0 : i32
    %c0_i32_1 = arith.constant 0 : i32
    return %c0_i32, %c0_i32_0 : i32, i32
  }
  func.func @transform_2(%arg0: i32) -> (i32, i32) {
    %c0_i32 = arith.constant 0 : i32
    %c0_i32_0 = arith.constant 0 : i32
    %c0_i32_1 = arith.constant 0 : i32
    return %c0_i32, %c0_i32_0 : i32, i32
  }
  func.func @transform_3(%arg0: i32) -> (i32, i32) {
    %c0_i32 = arith.constant 0 : i32
    %c0_i32_0 = arith.constant 0 : i32
    %c0_i32_1 = arith.constant 0 : i32
    return %c0_i32, %c0_i32_0 : i32, i32
  }
  func.func @transform_4(%arg0: i32) -> (i32, i32) {
    %c0_i32 = arith.constant 0 : i32
    %c0_i32_0 = arith.constant 0 : i32
    %c0_i32_1 = arith.constant 0 : i32
    return %c0_i32, %c0_i32_0 : i32, i32
  }
  func.func @transform_5(%arg0: i32) -> (i32, i32) {
    %c0_i32 = arith.constant 0 : i32
    %c0_i32_0 = arith.constant 0 : i32
    return %arg0, %c0_i32 : i32, i32
  }
}

</mosaic_0001>

<llo_original>
// kernel: tpu_custom_call.1
$region0: #{tpu_custom_call.1}
  #allocation0 [shape = 'u32[]', space=smem, size = 0x4, offset = 0x4, fixed_abs, tag = 'smem constant byte address 0x4 - core index']
  #allocation1 [shape = 'u32[72,128]{1,0:T(1,128)}', space=vmem, size = 0x9000, scoped, tag = 'internal scratch']
  %s0 = inlined_call_operand.vmem [shape: f32[8,32], index: 0, kind: input, shape index: {}]
  %s1 = inlined_call_operand.vmem [shape: f32[32,256], index: 1, kind: input, shape index: {}]
  %s2 = inlined_call_operand.vmem [shape: f32[1,256], index: 2, kind: input, shape index: {}]
  %s3 = inlined_call_operand.vmem [shape: f32[256,16], index: 3, kind: input, shape index: {}]
  %s4 = inlined_call_operand.vmem [shape: f32[1,16], index: 4, kind: input, shape index: {}]
  %s5 = inlined_call_operand.hbm [shape: f32[8,16], index: 5, kind: output, shape index: {}]
  %s6 = sld [smem:[#allocation0]]
  $region30: #{tpu_custom_call.1} parent=0
    _
  %s8 = ssub.s32 1, %s6
  %s9 = scalar_select 0, %s8, %s6
  $region1: #{tpu_custom_call.1} parent=0
    #allocation2 [shape = 'u8[4096]{0}', space=vmem, size = 0x1000, scoped, tag = 'output window, operand 0, single buffered']
    #allocation3 [shape = 's32[1]{0}', space=sflag, size = 0x4, scoped, tag = 'scoped memory for tpu_custom_call.1']
    %10 = vsyncpa [#allocation3], 0
    // Predicated region
    $region2: #{tpu_custom_call.1} parent=1 // pred_check
      _
    $region3: #{tpu_custom_call.1} parent=1 // pred_check_branch
      %12 = sbr.rel (0) target = $region5
    $region4: #{tpu_custom_call.1} parent=1 // pred_region
      _
    $region5: #{tpu_custom_call.1} parent=1 // pred_fallthru
      _
    // Predicated region
    $region6: #{tpu_custom_call.1} parent=1 // pred_check
      _
    $region7: #{tpu_custom_call.1} parent=1 // pred_check_branch
      %14 = sbr.rel (0) target = $region9
    $region8: #{tpu_custom_call.1} parent=1 // pred_region
      _
    $region9: #{tpu_custom_call.1} parent=1 // pred_fallthru
      _
    // Predicated region
    $region10: #{tpu_custom_call.1} parent=1 // pred_check
      _
    $region11: #{tpu_custom_call.1} parent=1 // pred_check_branch
      %16 = sbr.rel (0) target = $region13
    $region12: #{tpu_custom_call.1} parent=1 // pred_region
      _
    $region13: #{tpu_custom_call.1} parent=1 // pred_fallthru
      _
    // Predicated region
    $region14: #{tpu_custom_call.1} parent=1 // pred_check
      _
    $region15: #{tpu_custom_call.1} parent=1 // pred_check_branch
      %18 = sbr.rel (0) target = $region17
    $region16: #{tpu_custom_call.1} parent=1 // pred_region
      _
    $region17: #{tpu_custom_call.1} parent=1 // pred_fallthru
      _
    // Predicated region
    $region18: #{tpu_custom_call.1} parent=1 // pred_check
      _
    $region19: #{tpu_custom_call.1} parent=1 // pred_check_branch
      %20 = sbr.rel (0) target = $region21
    $region20: #{tpu_custom_call.1} parent=1 // pred_region
      _
    $region21: #{tpu_custom_call.1} parent=1 // pred_fallthru
      _
    %v21 = vld [vmem:[%s0] sm:$0xff]
    %v22 = vld [vmem:[%s1] sm:$0xff]
    %v23 = vld [vmem:[%s1 + $0x8] sm:$0xff]
    %v24 = vld [vmem:[%s1 + $0x10] sm:$0xff]
    %v25 = vld [vmem:[%s1 + $0x18] sm:$0xff]
    %v26 = vld [vmem:[%s1 + $0x20] sm:$0xff]
    %v27 = vld [vmem:[%s1 + $0x28] sm:$0xff]
    %v28 = vld [vmem:[%s1 + $0x30] sm:$0xff]
    %v29 = vld [vmem:[%s1 + $0x38] sm:$0xff]
    %v30 = vld [vmem:[%s2] sm:$0x3]
    %v32 = vperm.slane %v30, 0
    %v33 = vperm.slane %v30, 1
    %vm36 = vcmask 261120
    %v38 = vsel %vm36, %v21, 0
    %40 = vmatpush.msra.mxu0 0.0
    %41 = vmatpush.msra.mxu0 0.0
    %42 = vmatpush.msra.mxu0 0.0
    %43 = vmatpush.msra.mxu0 0.0
    %44 = vmatpush.msra.mxu0 0.0
    %45 = vmatpush.msra.mxu0 0.0
    %46 = vmatpush.msra.mxu0 0.0
    %47 = vmatpush.msra.mxu0 0.0
    %48 = vmatpush.msra.mxu0 0.0
    %49 = vmatpush.msra.mxu0 0.0
    %50 = vmatpush.msra.mxu0 0.0
    %51 = vmatpush.msra.mxu0 0.0
    %52 = vmatpush.msra.mxu0 %v28
    %53 = vmatpush.msra.mxu0 %v26
    %54 = vmatpush.msra.mxu0 %v24
    %55 = vmatpush.msra.mxu0 %v22
    %56 = vmatmul.f32.gmra.mxu0 %v38
    %v57 = vpop.f32.mrf.mxu0
    %v58 = vadd.f32 %v32, %v57
    %59 = vdwg.mxu0
    %60 = vmatpush.msra.mxu0 0.0
    %61 = vmatpush.msra.mxu0 0.0
    %62 = vmatpush.msra.mxu0 0.0
    %63 = vmatpush.msra.mxu0 0.0
    %64 = vmatpush.msra.mxu0 0.0
    %65 = vmatpush.msra.mxu0 0.0
    %66 = vmatpush.msra.mxu0 0.0
    %67 = vmatpush.msra.mxu0 0.0
    %68 = vmatpush.msra.mxu0 0.0
    %69 = vmatpush.msra.mxu0 0.0
    %70 = vmatpush.msra.mxu0 0.0
    %71 = vmatpush.msra.mxu0 0.0
    %72 = vmatpush.msra.mxu0 %v29
    %73 = vmatpush.msra.mxu0 %v27
    %74 = vmatpush.msra.mxu0 %v25
    %75 = vmatpush.msra.mxu0 %v23
    %76 = vmatmul.f32.gmra.mxu0 %v38
    %v77 = vpop.f32.mrf.mxu0
    %v78 = vadd.f32 %v33, %v77
    %79 = vdwg.mxu0
    %v80 = vmax.f32 %v58, 0.0
    %v81 = vmax.f32 %v78, 0.0
    %v82 = vld [vmem:[%s3] sm:$0xff]
    %v83 = vld [vmem:[%s3 + $0x8] sm:$0xff]
    %v84 = vld [vmem:[%s3 + $0x10] sm:$0xff]
    %v85 = vld [vmem:[%s3 + $0x18] sm:$0xff]
    %v86 = vld [vmem:[%s3 + $0x20] sm:$0xff]
    %v87 = vld [vmem:[%s3 + $0x28] sm:$0xff]
    %v88 = vld [vmem:[%s3 + $0x30] sm:$0xff]
    %v89 = vld [vmem:[%s3 + $0x38] sm:$0xff]
    %v90 = vld [vmem:[%s3 + $0x40] sm:$0xff]
    %v91 = vld [vmem:[%s3 + $0x48] sm:$0xff]
    %v92 = vld [vmem:[%s3 + $0x50] sm:$0xff]
    %v93 = vld [vmem:[%s3 + $0x58] sm:$0xff]
    %v94 = vld [vmem:[%s3 + $0x60] sm:$0xff]
    %v95 = vld [vmem:[%s3 + $0x68] sm:$0xff]
    %v96 = vld [vmem:[%s3 + $0x70] sm:$0xff]
    %v97 = vld [vmem:[%s3 + $0x78] sm:$0xff]
    %v98 = vld [vmem:[%s3 + $0x80] sm:$0xff]
    %v99 = vld [vmem:[%s3 + $0x88] sm:$0xff]
    %v100 = vld [vmem:[%s3 + $0x90] sm:$0xff]
    %v101 = vld [vmem:[%s3 + $0x98] sm:$0xff]
    %v102 = vld [vmem:[%s3 + $0xa0] sm:$0xff]
    %v103 = vld [vmem:[%s3 + $0xa8] sm:$0xff]
    %v104 = vld [vmem:[%s3 + $0xb0] sm:$0xff]
    %v105 = vld [vmem:[%s3 + $0xb8] sm:$0xff]
    %v106 = vld [vmem:[%s3 + $0xc0] sm:$0xff]
    %v107 = vld [vmem:[%s3 + $0xc8] sm:$0xff]
    %v108 = vld [vmem:[%s3 + $0xd0] sm:$0xff]
    %v109 = vld [vmem:[%s3 + $0xd8] sm:$0xff]
    %v110 = vld [vmem:[%s3 + $0xe0] sm:$0xff]
    %v111 = vld [vmem:[%s3 + $0xe8] sm:$0xff]
    %v112 = vld [vmem:[%s3 + $0xf0] sm:$0xff]
    %v113 = vld [vmem:[%s3 + $0xf8] sm:$0xff]
    %v114 = vld [vmem:[%s4] sm:$0x1]
    %v116 = vperm.slane %v114, 0
    %118 = vmatpush.msra.mxu0 %v97
    %119 = vmatpush.msra.mxu0 %v96
    %120 = vmatpush.msra.mxu0 %v95
    %121 = vmatpush.msra.mxu0 %v94
    %122 = vmatpush.msra.mxu0 %v93
    %123 = vmatpush.msra.mxu0 %v92
    %124 = vmatpush.msra.mxu0 %v91
    %125 = vmatpush.msra.mxu0 %v90
    %126 = vmatpush.msra.mxu0 %v89
    %127 = vmatpush.msra.mxu0 %v88
    %128 = vmatpush.msra.mxu0 %v87
    %129 = vmatpush.msra.mxu0 %v86
    %130 = vmatpush.msra.mxu0 %v85
    %131 = vmatpush.msra.mxu0 %v84
    %132 = vmatpush.msra.mxu0 %v83
    %133 = vmatpush.msra.mxu0 %v82
    %134 = vmatmul.f32.gmra.mxu0 %v80
    %v135 = vpop.f32.mrf.mxu0
    %v136 = vadd.f32 %v116, %v135
    %137 = vdwg.mxu0
    %138 = vmatpush.msra.mxu0 %v113
    %139 = vmatpush.msra.mxu0 %v112
    %140 = vmatpush.msra.mxu0 %v111
    %141 = vmatpush.msra.mxu0 %v110
    %142 = vmatpush.msra.mxu0 %v109
    %143 = vmatpush.msra.mxu0 %v108
    %144 = vmatpush.msra.mxu0 %v107
    %145 = vmatpush.msra.mxu0 %v106
    %146 = vmatpush.msra.mxu0 %v105
    %147 = vmatpush.msra.mxu0 %v104
    %148 = vmatpush.msra.mxu0 %v103
    %149 = vmatpush.msra.mxu0 %v102
    %150 = vmatpush.msra.mxu0 %v101
    %151 = vmatpush.msra.mxu0 %v100
    %152 = vmatpush.msra.mxu0 %v99
    %153 = vmatpush.msra.mxu0 %v98
    %154 = vmatmul.f32.gmra.mxu0 %v81
    %v155 = vpop.f32.mrf.mxu0
    %v156 = vadd.f32 %v136, %v155
    %157 = vdwg.mxu0
    %vm158 = vcmask 130048
    %159 = vst.msk [vmem:[#allocation2] sm:$0xff] %vm158, %v156
    // Predicated region
    $region22: #{tpu_custom_call.1} parent=1 // pred_check
      _
    $region23: #{tpu_custom_call.1} parent=1 // pred_check_branch
      %161 = sbr.rel (0) target = $region25
    $region24: #{tpu_custom_call.1} parent=1 // pred_region
      %163 = vsyncadd [#allocation3], 0
      %s165 = sshll.u32 [#allocation2], 4
      %s166 = int_to_ptr.vmem [resolvable:$true] %s165
      %s167 = sshll.u32 %s5, 4
      %s168 = int_to_ptr.hbm [resolvable:$true] %s167
      %170 = dma.vmem_to_hbm [thread:$0]  %s166, 128, %s168, [#allocation3]
    $region25: #{tpu_custom_call.1} parent=1 // pred_fallthru
      _
    // Predicated region
    $region26: #{tpu_custom_call.1} parent=1 // pred_check
      _
    $region27: #{tpu_custom_call.1} parent=1 // pred_check_branch
      %172 = sbr.rel (0) target = $region29
    $region28: #{tpu_custom_call.1} parent=1 // pred_region
      %174 = dma.done [#allocation3], 128
    $region29: #{tpu_custom_call.1} parent=1 // pred_fallthru
      _
    %175 = vsyncpa [#allocation3], 1

</llo_original>
